<compile_context>
chip_gen: v7x
topology: tpu7x:2x2x1
jax: 0.10.0
libtpu: 0.0.40
codegen_flags: <defaults>
</compile_context>

<pallas_src>
import functools
import math

import jax
import jax.numpy as jnp
from jax.experimental import pallas as pl
from jax.experimental.pallas import tpu as pltpu

DIM = 256           # args.dim
N_EXPERTS = 4       # args.n_routed_experts
TOPK = 2            # args.n_activated_experts
ROUTE_SCALE = 1.0   # args.route_scale
# TODO(synk): n_expert_groups > 1 group-limited routing, the dim==7168 bias path
#             and score_func='sigmoid' are not exercised by default ModelArgs;
#             only the flat softmax top-k path is implemented.


def gate_kernel(x_ref, w_ref, weights_ref, indices_ref):
    """Per token tile: scores[E, Tt] = W·xᵀ (contracted on D, tokens on lanes),
    f32 softmax over the expert (sublane) axis, iterative top-k, lane-dense stores."""
    x = x_ref[...]                      # [Tt, D] (f32 or bf16; wrapper matched w dtype)
    w = w_ref[...]                      # [E, D]

    # scores = linear(x, W) laid out as [E, Tt]; contracting on D for both
    # operands avoids any in-kernel transpose.  MXU accumulates in f32.
    scores = jax.lax.dot_general(
        w, x,
        dimension_numbers=(((1,), (1,)), ((), ())),
        preferred_element_type=jnp.float32)                          # [E, Tt]

    # softmax over experts in float32 (matches scores.softmax(dim=-1, fp32)).
    m = jnp.max(scores, axis=0, keepdims=True)                       # [1, Tt]
    e = jnp.exp(scores - m)
    probs = e * pl.reciprocal(jnp.sum(e, axis=0, keepdims=True), approx=False)

    expert_ids = jax.lax.broadcasted_iota(jnp.int32, probs.shape, 0)  # [E, Tt]

    # Iterative top-k.  Live entries of `sel` are exactly `probs`, so the
    # selected value IS cur_max — no gather/select/reduce needed per step.
    sel = probs
    top_w = []
    top_i = []
    for k in range(TOPK):
        cur_max = jnp.max(sel, axis=0, keepdims=True)                # [1, Tt]
        # first occurrence on exact ties (same convention as jax.lax.top_k)
        idx = jnp.min(jnp.where(sel == cur_max, expert_ids, N_EXPERTS),
                      axis=0, keepdims=True)                         # [1, Tt]
        top_w.append(cur_max)
        top_i.append(idx)
        if k + 1 < TOPK:                 # knockout on the last iteration is dead
            sel = jnp.where(expert_ids == idx, -jnp.inf, sel)

    weights = jnp.concatenate(top_w, axis=0)                          # [K, Tt]
    if ROUTE_SCALE != 1.0:               # trace-time constant; skip the no-op mul
        weights = weights * ROUTE_SCALE
    indices = jnp.concatenate(top_i, axis=0)                          # [K, Tt]

    weights_ref[...] = weights.astype(weights_ref.dtype)   # weights.type_as(x)
    indices_ref[...] = indices


def _select_tile_t(T: int, tile_t_max: int) -> int:
    """Pick the token-tile size.

    - T <= tile_t_max: single block covering everything (block dim == array dim
      is always layout-legal, regardless of dtype packing) — no per-step
      overhead, no masked partial tiles (best for single-TC v5e/v6e).
    - Otherwise: round the step count up to an even number (balanced across
      v7x's two TensorCores), tile = ceil(T / n_steps) rounded up to a multiple
      of 128 (lane-dense output stores; multiple of the 8/16 sublane packing).
    """
    if T <= tile_t_max:
        return T
    n_steps = pl.cdiv(T, tile_t_max)
    if n_steps % 2:
        n_steps += 1
    tile = -(-T // n_steps)               # ceil(T / n_steps)
    tile = -(-tile // 128) * 128          # round up to multiple of 128
    return min(tile, tile_t_max)


@functools.partial(jax.jit, static_argnames=("tile_t_max", "kt_layout"))
def gate_forward(x, weight, tile_t_max=4096, kt_layout=False):
    """x: [T, D], weight: [E, D] -> (weights [T, K] of x.dtype, indices [T, K] int32).

    With kt_layout=True the kernel-native [K, T] layout is returned (lets a
    downstream MoE dispatch skip the transposes on the decode path).
    """
    T, D = x.shape
    E, _ = weight.shape
    # Cast the tiny (4 KiB) gate weight once instead of upcasting every x tile.
    w = weight.astype(x.dtype)

    tile_t = _select_tile_t(T, tile_t_max)
    grid = (pl.cdiv(T, tile_t),)

    cost = pl.CostEstimate(
        flops=2 * T * D * E,
        transcendentals=T * E,
        bytes_accessed=(T * D * x.dtype.itemsize          # x read (dominant)
                        + E * D * w.dtype.itemsize        # weight read
                        + TOPK * T * (x.dtype.itemsize + 4)))  # outputs

    w_kt, i_kt = pl.pallas_call(
        gate_kernel,
        out_shape=(
            jax.ShapeDtypeStruct((TOPK, T), x.dtype),
            jax.ShapeDtypeStruct((TOPK, T), jnp.int32),
        ),
        grid_spec=pltpu.PrefetchScalarGridSpec(
            num_scalar_prefetch=0,
            grid=grid,
            in_specs=[
                pl.BlockSpec((tile_t, D), lambda i: (i, 0)),   # x token tile
                pl.BlockSpec((E, D), lambda i: (0, 0)),        # gate weight (resident)
            ],
            out_specs=[
                pl.BlockSpec((TOPK, tile_t), lambda i: (0, i)),  # weights [K, Tt]
                pl.BlockSpec((TOPK, tile_t), lambda i: (0, i)),  # indices [K, Tt]
            ],
        ),
        compiler_params=pltpu.CompilerParams(
            dimension_semantics=("parallel",)),
        cost_estimate=cost,
    )(x, w)

    if kt_layout:
        return w_kt, i_kt
    # Tiny [K, T] -> [T, K] transposes keep the kernel stores lane-dense while
    # preserving the module's output layout.
    return w_kt.T, i_kt.T


def reference_gate(x, weight):
    """Pure-JAX reference matching the PyTorch forward (softmax path, no bias),
    using the same dtype promotion as the kernel (weight cast to x.dtype)."""
    w = weight.astype(x.dtype)
    scores = jnp.dot(x, w.T, preferred_element_type=jnp.float32)
    probs = jax.nn.softmax(scores, axis=-1)
    idx = jax.lax.top_k(probs, TOPK)[1].astype(jnp.int32)
    wts = jnp.take_along_axis(probs, idx, axis=-1) * ROUTE_SCALE
    return wts.astype(x.dtype), idx


def _check(x, weight, tile_t_max=4096, atol=1e-5, rtol=1e-5):
    weights, indices = gate_forward(x, weight, tile_t_max=tile_t_max)
    jax.block_until_ready((weights, indices))
    ref_w, ref_i = reference_gate(x, weight)
    T = x.shape[0]
    assert weights.shape == (T, TOPK) and indices.shape == (T, TOPK)
    assert weights.dtype == x.dtype and indices.dtype == jnp.int32
    assert jnp.allclose(weights.astype(jnp.float32), ref_w.astype(jnp.float32),
                        atol=atol, rtol=rtol)
    assert jnp.array_equal(indices, ref_i)


if __name__ == "__main__":
    key = jax.random.PRNGKey(0)
    k_x, k_w, k_x2 = jax.random.split(key, 3)

    # xavier_normal_ init for weight [E, D]: std = sqrt(2 / (fan_in + fan_out))
    std = math.sqrt(2.0 / (DIM + N_EXPERTS))
    weight = std * jax.random.normal(k_w, (N_EXPERTS, DIM), dtype=jnp.float32)

    # Small shape consistent with the module: batch=2, seq=8 -> T=16 flattened tokens.
    batch, seq = 2, 8
    x_small = jax.random.normal(k_x, (batch * seq, DIM), dtype=jnp.float32)
    _check(x_small, weight)

    # Multi-tile path (force small tiles): T=300, tile=128 -> 3 steps, masked
    # partial last tile exercises the pipelined / partial-block stores.
    x_big = jax.random.normal(k_x2, (300, DIM), dtype=jnp.float32)
    _check(x_big, weight, tile_t_max=128)

    # bf16 activations: weight cast once in the wrapper, softmax/top-k stay f32.
    _check(x_small.astype(jnp.bfloat16), weight, atol=2e-2, rtol=2e-2)

    print("KERNEL_OK")
</pallas_src>

<mosaic_0001>
module attributes {stable_mosaic.version = 11 : i64} {
  func.func @gate_kernel(%arg0: i32, %arg1: memref<16x256xf32, #tpu.memory_space<vmem>>, %arg2: memref<4x256xf32, #tpu.memory_space<vmem>>, %arg3: memref<2x16xf32, #tpu.memory_space<vmem>>, %arg4: memref<2x16xi32, #tpu.memory_space<vmem>>) attributes {dimension_semantics = [#tpu.dimension_semantics<parallel>], iteration_bounds = array<i64: 1>, scalar_prefetch = 0 : i64, scratch_operands = 0 : i64, tpu.core_type = #tpu.core_type<tc>, window_params = [{transform_indices = @transform_0, window_bounds = array<i64: 16, 256>}, {pipeline_mode = #tpu.pipeline_mode<synchronous>, transform_indices = @transform_1, window_bounds = array<i64: 4, 256>}, {transform_indices = @transform_2, window_bounds = array<i64: 2, 16>}, {transform_indices = @transform_3, window_bounds = array<i64: 2, 16>}]} {
    %c0 = arith.constant 0 : index
    %c0_0 = arith.constant 0 : index
    %0 = vector.load %arg1[%c0, %c0_0] : memref<16x256xf32, #tpu.memory_space<vmem>>, vector<16x256xf32>
    %c0_1 = arith.constant 0 : index
    %c0_2 = arith.constant 0 : index
    %1 = vector.load %arg2[%c0_1, %c0_2] : memref<4x256xf32, #tpu.memory_space<vmem>>, vector<4x256xf32>
    %cst = arith.constant dense<0.000000e+00> : vector<4x16xf32>
    %2 = tpu.matmul %1, %0, %cst {dimension_numbers = #tpu.dot_dimension_numbers<[1], [1], [0], [0], [0, 0, 1, 0], [], []>} : vector<4x256xf32>, vector<16x256xf32>, vector<4x16xf32> -> vector<4x16xf32>
    %cst_3 = arith.constant dense<0xFF800000> : vector<16xf32>
    %3 = vector.multi_reduction <maximumf>, %2, %cst_3 [0] : vector<4x16xf32> to vector<16xf32>
    %4 = vector.shape_cast %3 : vector<16xf32> to vector<1x16xf32>
    %5 = vector.broadcast %4 : vector<1x16xf32> to vector<4x16xf32>
    %6 = arith.subf %2, %5 : vector<4x16xf32>
    %7 = math.exp %6 : vector<4x16xf32>
    %cst_4 = arith.constant dense<0.000000e+00> : vector<16xf32>
    %8 = vector.multi_reduction <add>, %7, %cst_4 [0] : vector<4x16xf32> to vector<16xf32>
    %9 = vector.shape_cast %8 : vector<16xf32> to vector<1x16xf32>
    %10 = tpu.reciprocal %9 : vector<1x16xf32> -> vector<1x16xf32>
    %11 = vector.broadcast %10 : vector<1x16xf32> to vector<4x16xf32>
    %12 = arith.mulf %7, %11 : vector<4x16xf32>
    %13 = tpu.iota {dimensions = array<i32: 0>} : vector<4x16xi32>
    %cst_5 = arith.constant dense<0xFF800000> : vector<16xf32>
    %14 = vector.multi_reduction <maximumf>, %12, %cst_5 [0] : vector<4x16xf32> to vector<16xf32>
    %15 = vector.shape_cast %14 : vector<16xf32> to vector<1x16xf32>
    %16 = vector.broadcast %15 : vector<1x16xf32> to vector<4x16xf32>
    %17 = arith.cmpf oeq, %12, %16 : vector<4x16xf32>
    %c4_i32 = arith.constant 4 : i32
    %18 = vector.broadcast %c4_i32 : i32 to vector<4x16xi32>
    %19 = arith.select %17, %13, %18 : vector<4x16xi1>, vector<4x16xi32>
    %cst_6 = arith.constant dense<2147483647> : vector<16xi32>
    %20 = vector.multi_reduction <minsi>, %19, %cst_6 [0] : vector<4x16xi32> to vector<16xi32>
    %21 = vector.shape_cast %20 : vector<16xi32> to vector<1x16xi32>
    %22 = vector.broadcast %21 : vector<1x16xi32> to vector<4x16xi32>
    %23 = arith.cmpi eq, %13, %22 : vector<4x16xi32>
    %cst_7 = arith.constant 0xFF800000 : f32
    %24 = vector.broadcast %cst_7 : f32 to vector<4x16xf32>
    %25 = arith.select %23, %24, %12 : vector<4x16xi1>, vector<4x16xf32>
    %cst_8 = arith.constant dense<0xFF800000> : vector<16xf32>
    %26 = vector.multi_reduction <maximumf>, %25, %cst_8 [0] : vector<4x16xf32> to vector<16xf32>
    %27 = vector.shape_cast %26 : vector<16xf32> to vector<1x16xf32>
    %28 = vector.broadcast %27 : vector<1x16xf32> to vector<4x16xf32>
    %29 = arith.cmpf oeq, %25, %28 : vector<4x16xf32>
    %c4_i32_9 = arith.constant 4 : i32
    %30 = vector.broadcast %c4_i32_9 : i32 to vector<4x16xi32>
    %31 = arith.select %29, %13, %30 : vector<4x16xi1>, vector<4x16xi32>
    %cst_10 = arith.constant dense<2147483647> : vector<16xi32>
    %32 = vector.multi_reduction <minsi>, %31, %cst_10 [0] : vector<4x16xi32> to vector<16xi32>
    %33 = vector.shape_cast %32 : vector<16xi32> to vector<1x16xi32>
    %34 = tpu.concatenate %15, %27 in 0 : vector<1x16xf32>, vector<1x16xf32> -> vector<2x16xf32>
    %35 = tpu.concatenate %21, %33 in 0 : vector<1x16xi32>, vector<1x16xi32> -> vector<2x16xi32>
    %c0_11 = arith.constant 0 : index
    %c0_12 = arith.constant 0 : index
    %36 = vector.load %arg3[%c0_11, %c0_12] : memref<2x16xf32, #tpu.memory_space<vmem>>, vector<2x16xf32>
    tpu.vector_store %arg3[%c0_11, %c0_12], %34 {strides = array<i32>} : memref<2x16xf32, #tpu.memory_space<vmem>>, vector<2x16xf32>,
    %c0_13 = arith.constant 0 : index
    %c0_14 = arith.constant 0 : index
    %37 = vector.load %arg4[%c0_13, %c0_14] : memref<2x16xi32, #tpu.memory_space<vmem>>, vector<2x16xi32>
    tpu.vector_store %arg4[%c0_13, %c0_14], %35 {strides = array<i32>} : memref<2x16xi32, #tpu.memory_space<vmem>>, vector<2x16xi32>,
    return
  }
  func.func @transform_0(%arg0: i32) -> (i32, i32) {
    %c0_i32 = arith.constant 0 : i32
    %c0_i32_0 = arith.constant 0 : i32
    return %arg0, %c0_i32 : i32, i32
  }
  func.func @transform_1(%arg0: i32) -> (i32, i32) {
    %c0_i32 = arith.constant 0 : i32
    %c0_i32_0 = arith.constant 0 : i32
    %c0_i32_1 = arith.constant 0 : i32
    return %c0_i32, %c0_i32_0 : i32, i32
  }
  func.func @transform_2(%arg0: i32) -> (i32, i32) {
    %c0_i32 = arith.constant 0 : i32
    %c0_i32_0 = arith.constant 0 : i32
    return %c0_i32, %arg0 : i32, i32
  }
  func.func @transform_3(%arg0: i32) -> (i32, i32) {
    %c0_i32 = arith.constant 0 : i32
    %c0_i32_0 = arith.constant 0 : i32
    return %c0_i32, %arg0 : i32, i32
  }
}

</mosaic_0001>

<llo_original>
// kernel: gate_forward.1
$region0: #{gate_forward.1}
  #allocation0 [shape = 'u32[]', space=smem, size = 0x4, offset = 0x4, fixed_abs, tag = 'smem constant byte address 0x4 - core index']
  #allocation1 [shape = 'u32[144,128]{1,0:T(1,128)}', space=vmem, size = 0x12000, scoped, tag = 'internal scratch']
  %s0 = inlined_call_operand.hbm [shape: f32[16,256], index: 0, kind: input, shape index: {}]
  %s1 = inlined_call_operand.hbm [shape: f32[4,256], index: 1, kind: input, shape index: {}]
  %s2 = inlined_call_operand.hbm [shape: f32[2,16], index: 2, kind: output, shape index: {0}]
  %s3 = inlined_call_operand.hbm [shape: s32[2,16], index: 3, kind: output, shape index: {1}]
  %4 = xla_tuple %s2, %s3
  %s5 = sld [smem:[#allocation0]]
  $region34: #{gate_forward.1} parent=0
    _
  %s7 = ssub.s32 1, %s5
  %s8 = scalar_select 0, %s7, %s5
  $region1: #{gate_forward.1} parent=0
    #allocation2 [shape = 'u8[16384]{0}', space=vmem, size = 0x4000, scoped, tag = 'input window, operand 0, single buffered']
    #allocation3 [shape = 's32[1]{0}', space=sflag, size = 0x4, scoped, tag = 'scoped memory for gate_forward.1']
    #allocation4 [shape = 's32[1]{0}', space=sflag, size = 0x4, scoped, tag = 'scoped memory for gate_forward.1']
    #allocation5 [shape = 'u8[4096]{0}', space=vmem, size = 0x1000, scoped, tag = 'input window, operand 1, single buffered']
    #allocation6 [shape = 's32[1]{0}', space=sflag, size = 0x4, scoped, tag = 'scoped memory for gate_forward.1']
    #allocation7 [shape = 'u8[1024]{0}', space=vmem, size = 0x400, scoped, tag = 'output window, operand 0, single buffered']
    #allocation8 [shape = 'u8[1024]{0}', space=vmem, size = 0x400, scoped, tag = 'output window, operand 1, single buffered']
    #allocation9 [shape = 's32[1]{0}', space=sflag, size = 0x4, scoped, tag = 'scoped memory for gate_forward.1']
    %9 = vsyncpa [#allocation3], 0
    %10 = vsyncpa [#allocation6], 0
    %11 = vsyncpa [#allocation4], 0
    %12 = vsyncpa [#allocation9], 0
    // Predicated region
    $region2: #{gate_forward.1} parent=1 // pred_check
      _
    $region3: #{gate_forward.1} parent=1 // pred_check_branch
      %14 = sbr.rel (0) target = $region5
    $region4: #{gate_forward.1} parent=1 // pred_region
      %s16 = ssub.s32 512, 512
      %17 = vsyncadd [#allocation3], %s16
      %s18 = sshll.u32 [#allocation2], 4
      %s19 = int_to_ptr.vmem [resolvable:$true] %s18
      %24 = dma.hbm_to_vmem [thread:$0]  %s0, 512, %s19, [#allocation3], 256, 256, 16
    $region5: #{gate_forward.1} parent=1 // pred_fallthru
      _
    // Predicated region
    $region6: #{gate_forward.1} parent=1 // pred_check
      _
    $region7: #{gate_forward.1} parent=1 // pred_check_branch
      %26 = sbr.rel (0) target = $region9
    $region8: #{gate_forward.1} parent=1 // pred_region
      %s28 = ssub.s32 128, 128
      %29 = vsyncadd [#allocation6], %s28
      %s31 = sshll.u32 [#allocation5], 4
      %s32 = int_to_ptr.vmem [resolvable:$true] %s31
      %34 = dma.hbm_to_vmem [thread:$0]  %s1, 128, %s32, [#allocation6]
    $region9: #{gate_forward.1} parent=1 // pred_fallthru
      _
    // Predicated region
    $region10: #{gate_forward.1} parent=1 // pred_check
      _
    $region11: #{gate_forward.1} parent=1 // pred_check_branch
      %36 = sbr.rel (0) target = $region13
    $region12: #{gate_forward.1} parent=1 // pred_region
      %37 = dma.done [#allocation3], 512
    $region13: #{gate_forward.1} parent=1 // pred_fallthru
      _
    // Predicated region
    $region14: #{gate_forward.1} parent=1 // pred_check
      _
    $region15: #{gate_forward.1} parent=1 // pred_check_branch
      %39 = sbr.rel (0) target = $region17
    $region16: #{gate_forward.1} parent=1 // pred_region
      %40 = dma.done [#allocation6], 128
    $region17: #{gate_forward.1} parent=1 // pred_fallthru
      _
    %v41 = vld [vmem:[#allocation2] sm:$0xff]
    %v42 = vld [vmem:[#allocation2 + $0x8] sm:$0xff]
    %v43 = vld [vmem:[#allocation2 + $0x10] sm:$0xff]
    %v44 = vld [vmem:[#allocation2 + $0x18] sm:$0xff]
    %v45 = vld [vmem:[#allocation5] sm:$0xff]
    %v47 = vcombine.high %v45, %v45
    %49 = vmatprep.subr.mxu0 %v42
    %50 = vmatpush1.xpose.msra.mxu0 %v41
    %51 = vmatprep.subr.mxu0 %v44
    %52 = vmatpush1.xpose.msra.mxu0 %v43
    %53 = vmatprep.subr.mxu0 0.0
    %54 = vmatpush1.xpose.msra.mxu0 0.0
    %55 = vmatprep.subr.mxu0 0.0
    %56 = vmatpush1.xpose.msra.mxu0 0.0
    %57 = vmatprep.subr.mxu0 0.0
    %58 = vmatpush1.xpose.msra.mxu0 0.0
    %59 = vmatprep.subr.mxu0 0.0
    %60 = vmatpush1.xpose.msra.mxu0 0.0
    %61 = vmatprep.subr.mxu0 0.0
    %62 = vmatpush1.xpose.msra.mxu0 0.0
    %63 = vmatprep.subr.mxu0 0.0
    %64 = vmatpush1.xpose.msra.mxu0 0.0
    %65 = vmatprep.subr.mxu0 0.0
    %66 = vmatpush1.xpose.msra.mxu0 0.0
    %67 = vmatprep.subr.mxu0 0.0
    %68 = vmatpush1.xpose.msra.mxu0 0.0
    %69 = vmatprep.subr.mxu0 0.0
    %70 = vmatpush1.xpose.msra.mxu0 0.0
    %71 = vmatprep.subr.mxu0 0.0
    %72 = vmatpush1.xpose.msra.mxu0 0.0
    %73 = vmatprep.subr.mxu0 0.0
    %74 = vmatpush1.xpose.msra.mxu0 0.0
    %75 = vmatprep.subr.mxu0 0.0
    %76 = vmatpush1.xpose.msra.mxu0 0.0
    %77 = vmatprep.subr.mxu0 0.0
    %78 = vmatpush1.xpose.msra.mxu0 0.0
    %79 = vmatprep.subr.mxu0 0.0
    %80 = vmatpush1.xpose.msra.mxu0 0.0
    %81 = vmatprep.subr.mxu0 0.0
    %82 = vmatpush1.xpose.msra.mxu0 0.0
    %83 = vmatprep.subr.mxu0 0.0
    %84 = vmatpush1.xpose.msra.mxu0 0.0
    %85 = vmatprep.subr.mxu0 0.0
    %86 = vmatpush1.xpose.msra.mxu0 0.0
    %87 = vmatprep.subr.mxu0 0.0
    %88 = vmatpush1.xpose.msra.mxu0 0.0
    %89 = vmatprep.subr.mxu0 0.0
    %90 = vmatpush1.xpose.msra.mxu0 0.0
    %91 = vmatprep.subr.mxu0 0.0
    %92 = vmatpush1.xpose.msra.mxu0 0.0
    %93 = vmatprep.subr.mxu0 0.0
    %94 = vmatpush1.xpose.msra.mxu0 0.0
    %95 = vmatprep.subr.mxu0 0.0
    %96 = vmatpush1.xpose.msra.mxu0 0.0
    %97 = vmatprep.subr.mxu0 0.0
    %98 = vmatpush1.xpose.msra.mxu0 0.0
    %99 = vmatprep.subr.mxu0 0.0
    %100 = vmatpush1.xpose.msra.mxu0 0.0
    %101 = vmatprep.subr.mxu0 0.0
    %102 = vmatpush1.xpose.msra.mxu0 0.0
    %103 = vmatprep.subr.mxu0 0.0
    %104 = vmatpush1.xpose.msra.mxu0 0.0
    %105 = vmatprep.subr.mxu0 0.0
    %106 = vmatpush1.xpose.msra.mxu0 0.0
    %107 = vmatprep.subr.mxu0 0.0
    %108 = vmatpush1.xpose.msra.mxu0 0.0
    %109 = vmatprep.subr.mxu0 0.0
    %110 = vmatpush1.xpose.msra.mxu0 0.0
    %111 = vmatprep.subr.mxu0 0.0
    %112 = vmatpush1.xpose.msra.mxu0 0.0
    %113 = vmatprep.mubr.f32.mxu0 %v47
    %114 = vmatmul.mubr.f32.gmra.mrb[0].mxu0 %v45
    %v115 = vpop.f32.mrb[0].mxu0
    %v116 = vadd.f32 0.0, %v115
    %v117 = vpop.f32.mrb[0].mxu0
    %118 = vdwg.mxu0
    %vm119 = vcmask 125952
    %v120 = vsel %vm119, %v116, -inf
    %v121 = vrot.slane %v120, 4
    %v122 = vmax.f32 %v120, %v121
    %v123 = vrot.slane %v122, 2
    %v124 = vmax.f32 %v122, %v123
    %v125 = vrot.slane %v124, 1
    %v126 = vmax.f32 %v124, %v125
    %v127 = vsub.f32 %v116, %v126
    %v128 = vmul.f32 %v127, 1.442695
    %v129 = vpow.pop %v128
    %v130 = vsel %vm119, %v129, 0.0
    %v131 = vrot.slane %v130, 4
    %v132 = vadd.f32 %v130, %v131
    %v133 = vrot.slane %v132, 2
    %v134 = vadd.f32 %v132, %v133
    %v135 = vrot.slane %v134, 1
    %v136 = vadd.f32 %v134, %v135
    %v137 = vrcp.pop %v136
    %v138 = vmul.f32 %v129, %v137
    %v139 = vlaneseq
    %v140 = vshrl.u32 %v139, 7
    %v141 = vsel %vm119, %v138, -inf
    %v142 = vrot.slane %v141, 4
    %v143 = vmax.f32 %v141, %v142
    %v144 = vrot.slane %v143, 2
    %v145 = vmax.f32 %v143, %v144
    %v146 = vrot.slane %v145, 1
    %v147 = vmax.f32 %v145, %v146
    %vm148 = vcmp.eq.f32.partialorder %v138, %v147
    %v149 = vsel %vm148, %v140, 4
    %v150 = vsel %vm119, %v149, 2147483647
    %v151 = vrot.slane %v150, 4
    %vm152 = vcmp.lt.s32.totalorder %v150, %v151
    %v153 = vsel %vm152, %v150, %v151
    %v154 = vrot.slane %v153, 2
    %vm155 = vcmp.lt.s32.totalorder %v153, %v154
    %v156 = vsel %vm155, %v153, %v154
    %v157 = vrot.slane %v156, 1
    %vm158 = vcmp.lt.s32.totalorder %v156, %v157
    %v159 = vsel %vm158, %v156, %v157
    %vm160 = vcmp.eq.s32.totalorder %v140, %v159
    %v161 = vsel %vm160, -inf, %v138
    %v162 = vsel %vm119, %v161, -inf
    %v163 = vrot.slane %v162, 4
    %v164 = vmax.f32 %v162, %v163
    %v165 = vrot.slane %v164, 2
    %v166 = vmax.f32 %v164, %v165
    %v167 = vrot.slane %v166, 1
    %v168 = vmax.f32 %v166, %v167
    %vm169 = vcmp.eq.f32.partialorder %v161, %v168
    %v170 = vsel %vm169, %v140, 4
    %v171 = vsel %vm119, %v170, 2147483647
    %v172 = vrot.slane %v171, 4
    %vm173 = vcmp.lt.s32.totalorder %v171, %v172
    %v174 = vsel %vm173, %v171, %v172
    %v175 = vrot.slane %v174, 2
    %vm176 = vcmp.lt.s32.totalorder %v174, %v175
    %v177 = vsel %vm176, %v174, %v175
    %v178 = vrot.slane %v177, 1
    %vm179 = vcmp.lt.s32.totalorder %v177, %v178
    %v180 = vsel %vm179, %v177, %v178
    %vm181 = vcmask 1040384
    %v182 = vsel %vm181, %v147, %v168
    %v183 = vsel %vm181, %v159, %v180
    %vm184 = vcmask 123904
    %185 = vst.msk [vmem:[#allocation7] sm:$0x3] %vm184, %v182
    %186 = vst.msk [vmem:[#allocation8] sm:$0x3] %vm184, %v183
    // Predicated region
    $region18: #{gate_forward.1} parent=1 // pred_check
      _
    $region19: #{gate_forward.1} parent=1 // pred_check_branch
      %188 = sbr.rel (0) target = $region21
    $region20: #{gate_forward.1} parent=1 // pred_region
      %s190 = ssub.s32 32, 32
      %191 = vsyncadd [#allocation4], %s190
      %s193 = sshll.u32 [#allocation7], 4
      %s194 = int_to_ptr.vmem [resolvable:$true] %s193
      %196 = dma.vmem_to_hbm [thread:$0]  %s194, 32, %s2, [#allocation4]
    $region21: #{gate_forward.1} parent=1 // pred_fallthru
      _
    // Predicated region
    $region22: #{gate_forward.1} parent=1 // pred_check
      _
    $region23: #{gate_forward.1} parent=1 // pred_check_branch
      %198 = sbr.rel (0) target = $region25
    $region24: #{gate_forward.1} parent=1 // pred_region
      %s200 = ssub.s32 32, 32
      %201 = vsyncadd [#allocation9], %s200
      %s203 = sshll.u32 [#allocation8], 4
      %s204 = int_to_ptr.vmem [resolvable:$true] %s203
      %206 = dma.vmem_to_hbm [thread:$0]  %s204, 32, %s3, [#allocation9]
    $region25: #{gate_forward.1} parent=1 // pred_fallthru
      _
    // Predicated region
    $region26: #{gate_forward.1} parent=1 // pred_check
      _
    $region27: #{gate_forward.1} parent=1 // pred_check_branch
      %208 = sbr.rel (0) target = $region29
    $region28: #{gate_forward.1} parent=1 // pred_region
      %209 = dma.done [#allocation4], 32
    $region29: #{gate_forward.1} parent=1 // pred_fallthru
      _
    // Predicated region
    $region30: #{gate_forward.1} parent=1 // pred_check
      _
    $region31: #{gate_forward.1} parent=1 // pred_check_branch
      %211 = sbr.rel (0) target = $region33
    $region32: #{gate_forward.1} parent=1 // pred_region
      %212 = dma.done [#allocation9], 32
    $region33: #{gate_forward.1} parent=1 // pred_fallthru
      _
    %213 = vsyncpa [#allocation3], 1
    %214 = vsyncpa [#allocation6], 1
    %215 = vsyncpa [#allocation4], 1
    %216 = vsyncpa [#allocation9], 1

</llo_original>
